<compile_context>
chip_gen: v5e
topology: v5e:2x2
jax: 0.10.0
libtpu: 0.0.40
codegen_flags: <defaults>
</compile_context>

<pallas_src>
import numpy as np
import jax
import jax.numpy as jnp
from jax.experimental import pallas as pl
from jax.experimental.pallas import tpu as pltpu


# ---------------------------------------------------------------------------
# Glue: pooling / interpolation matrices (match PyTorch semantics exactly)
# ---------------------------------------------------------------------------
def adaptive_avg_pool_matrix(in_size: int, out_size: int) -> np.ndarray:
    """A[out, in]: 1-D adaptive average pooling (PyTorch bin rule)."""
    A = np.zeros((out_size, in_size), dtype=np.float32)
    for i in range(out_size):
        start = (i * in_size) // out_size
        end = -(-((i + 1) * in_size) // out_size)  # ceil
        A[i, start:end] = 1.0 / float(end - start)
    return A


def bilinear_upsample_matrix(out_size: int, in_size: int) -> np.ndarray:
    """U[out, in]: 1-D bilinear interpolation, align_corners=False (PyTorch)."""
    U = np.zeros((out_size, in_size), dtype=np.float32)
    scale = in_size / out_size
    for i in range(out_size):
        src = (i + 0.5) * scale - 0.5
        if src < 0.0:
            src = 0.0
        i0 = min(int(np.floor(src)), in_size - 1)
        i1 = min(i0 + 1, in_size - 1)
        l1 = src - i0
        U[i, i0] += 1.0 - l1
        U[i, i1] += l1
    return U


def _round_up(x: int, m: int) -> int:
    return ((x + m - 1) // m) * m


def _vmem_limit(nbytes: int) -> int:
    # explicit scoped-VMEM limit from the operand footprint, with headroom
    return int(min(max(2 * nbytes + (2 << 20), 16 << 20), 48 << 20))


def _bytes(shape, dtype) -> int:
    return int(np.prod(shape)) * np.dtype(dtype).itemsize


# ---------------------------------------------------------------------------
# Pallas kernels
# ---------------------------------------------------------------------------
def _psp_pool_kernel(x_ref, m_ref, wcat_ref, shift_cat_ref, mask_ref,
                     wf_stack_ref, y_ref, pooled_acc):
    """Pass 1: pool over HW tiles (f32 VMEM accumulator), then branch convs.

    On the last HW tile:
      Z = relu(pooled_all @ W_cat + shift_cat) * mask ; y = Z @ WF_stack
    """
    j = pl.program_id(1)

    @pl.when(j == 0)
    def _():
        pooled_acc[...] = jnp.zeros_like(pooled_acc)

    # (S_pad, T_hw) @ (T_hw, C_pad) -> (S_pad, C_pad), bf16 MXU, f32 accumulate
    pooled_acc[...] += jnp.dot(m_ref[...], x_ref[0],
                               preferred_element_type=jnp.float32)

    @pl.when(j == pl.num_programs(1) - 1)
    def _():
        pooled_bf = pooled_acc[...].astype(jnp.bfloat16)
        # all branch 1x1 convs (BN folded) in one matmul; wrong-branch columns
        # are zeroed by `mask` after the shift+ReLU.
        z = jnp.dot(pooled_bf, wcat_ref[...], preferred_element_type=jnp.float32)
        z = jnp.maximum(z + shift_cat_ref[...], 0.0) * mask_ref[...]
        # fold each branch's slice of the fusion conv: (S_pad, KR) @ (KR, C_pad)
        y = jnp.dot(z.astype(jnp.bfloat16), wf_stack_ref[...],
                    preferred_element_type=jnp.float32)
        y_ref[0] = y.astype(y_ref.dtype)


def _psp_out_kernel(x_ref, y_ref, u_ref, wfx_ref, shift_f_ref, o_ref):
    """Pass 2: identity path + one fused upsample/branch matmul + bias + ReLU."""
    acc = jnp.dot(x_ref[0], wfx_ref[...], preferred_element_type=jnp.float32)
    acc = acc + jnp.dot(u_ref[...], y_ref[0], preferred_element_type=jnp.float32)
    acc = acc + shift_f_ref[...]
    o_ref[0] = jnp.maximum(acc, 0.0).astype(o_ref.dtype)


# ---------------------------------------------------------------------------
# Parameter init (deterministic, mirrors the PyTorch module's shapes)
# ---------------------------------------------------------------------------
def init_params(key, in_channels, pool_sizes):
    r = in_channels // 4
    keys = iter(jax.random.split(key, 8 * len(pool_sizes) + 8))
    params = {"branches": []}
    for _ in pool_sizes:
        params["branches"].append(dict(
            w=jax.random.normal(next(keys), (r, in_channels), jnp.float32) * 0.3,
            gamma=jax.random.uniform(next(keys), (r,), jnp.float32, 0.5, 1.5),
            beta=jax.random.normal(next(keys), (r,), jnp.float32) * 0.1,
            mean=jax.random.normal(next(keys), (r,), jnp.float32) * 0.1,
            var=jax.random.uniform(next(keys), (r,), jnp.float32, 0.5, 1.5),
        ))
    c_cat = in_channels + len(pool_sizes) * r
    params["final"] = dict(
        w=jax.random.normal(next(keys), (in_channels, c_cat), jnp.float32) * 0.3,
        b=jax.random.normal(next(keys), (in_channels,), jnp.float32) * 0.1,
        gamma=jax.random.uniform(next(keys), (in_channels,), jnp.float32, 0.5, 1.5),
        beta=jax.random.normal(next(keys), (in_channels,), jnp.float32) * 0.1,
        mean=jax.random.normal(next(keys), (in_channels,), jnp.float32) * 0.1,
        var=jax.random.uniform(next(keys), (in_channels,), jnp.float32, 0.5, 1.5),
    )
    return params


def _fold_bn(w_t, gamma, beta, mean, var, bias=None, eps=1e-5):
    # BN(x @ w_t + bias) == x @ (w_t * s) + (bias * s + t)
    s = gamma / jnp.sqrt(var + eps)
    t = beta - mean * s
    w_s = w_t * s[None, :]
    shift = t if bias is None else bias * s + t
    return w_s, shift


# ---------------------------------------------------------------------------
# Wrapper: builds packed/padded operands and calls the two Pallas kernels
# ---------------------------------------------------------------------------
def pyramid_pooling_forward(x_nchw, params, pool_sizes, eps=1e-5, hw_tile=512):
    N, C, H, W = x_nchw.shape
    HW = H * W
    r = C // 4
    K = len(pool_sizes)
    S = sum(s * s for s in pool_sizes)            # total pooled rows (50 for 1,2,3,6)

    # padded sizes: lane dims multiples of 128, pooled-row dim multiple of 8
    C_pad = _round_up(C, 128)
    KR = K * r
    KR_pad = _round_up(KR, 128)
    S_pad = max(_round_up(S, 8), 64)

    # HW tiling (multiple of 128 so the M_all block's last dim stays aligned)
    T_hw = max(128, _round_up(min(hw_tile, HW), 128))
    HW_pad = _round_up(HW, T_hw)
    n_hw = HW_pad // T_hw

    # ---------------- packed pooling / upsample matrices + branch mask --------
    M_all = np.zeros((S_pad, HW_pad), dtype=np.float32)   # (pooled rows, HW)
    U_all = np.zeros((HW_pad, S_pad), dtype=np.float32)   # (HW, pooled rows)
    mask = np.zeros((S_pad, KR_pad), dtype=np.float32)    # branch-block selector
    row = 0
    for b, s in enumerate(pool_sizes):
        A = np.kron(adaptive_avg_pool_matrix(H, s), adaptive_avg_pool_matrix(W, s))
        Um = np.kron(bilinear_upsample_matrix(H, s), bilinear_upsample_matrix(W, s))
        M_all[row:row + s * s, :HW] = A
        U_all[:HW, row:row + s * s] = Um
        mask[row:row + s * s, b * r:(b + 1) * r] = 1.0
        row += s * s

    # ---------------- folded + packed weights ---------------------------------
    f = params["final"]
    # PyTorch cat order: [branch_0, ..., branch_{K-1}, x]
    wf_s, shift_f = _fold_bn(f["w"].T, f["gamma"], f["beta"], f["mean"],
                             f["var"], bias=f["b"], eps=eps)       # (C_cat,C),(C,)

    W_cat = jnp.zeros((C_pad, KR_pad), jnp.float32)
    shift_cat = jnp.zeros((1, KR_pad), jnp.float32)
    for b in range(K):
        br = params["branches"][b]
        wb_s, shift_b = _fold_bn(br["w"].T, br["gamma"], br["beta"],
                                 br["mean"], br["var"], bias=None, eps=eps)
        W_cat = W_cat.at[:C, b * r:(b + 1) * r].set(wb_s)
        shift_cat = shift_cat.at[0, b * r:(b + 1) * r].set(shift_b)

    WF_stack = jnp.zeros((KR_pad, C_pad), jnp.float32).at[:KR, :C].set(wf_s[:KR, :])
    wf_x = jnp.zeros((C_pad, C_pad), jnp.float32).at[:C, :C].set(wf_s[KR:, :])
    shift_f_p = jnp.zeros((1, C_pad), jnp.float32).at[0, :C].set(shift_f)

    # ---------------- operands (bf16 for MXU, f32 for shifts/mask) ------------
    x2d = jnp.transpose(x_nchw, (0, 2, 3, 1)).reshape(N, HW, C)
    x2d = jnp.pad(x2d, ((0, 0), (0, HW_pad - HW), (0, C_pad - C)))
    x_bf = x2d.astype(jnp.bfloat16)
    M_bf = jnp.asarray(M_all).astype(jnp.bfloat16)
    U_bf = jnp.asarray(U_all).astype(jnp.bfloat16)
    mask_f = jnp.asarray(mask)
    W_cat_bf = W_cat.astype(jnp.bfloat16)
    WF_stack_bf = WF_stack.astype(jnp.bfloat16)
    wf_x_bf = wf_x.astype(jnp.bfloat16)

    grid = (N, n_hw)

    def _const_spec(shape):
        zeros = (0,) * len(shape)
        return pl.BlockSpec(shape, lambda n, j: zeros)

    # ---------------- pass 1: pooling + branch convs ---------------------------
    pool_blocks = [
        ((1, T_hw, C_pad), jnp.bfloat16),      # x tile
        ((S_pad, T_hw), jnp.bfloat16),         # M tile
        ((C_pad, KR_pad), jnp.bfloat16),       # W_cat
        ((1, KR_pad), jnp.float32),            # shift_cat
        ((S_pad, KR_pad), jnp.float32),        # mask
        ((KR_pad, C_pad), jnp.bfloat16),       # WF_stack
        ((1, S_pad, C_pad), jnp.bfloat16),     # y out
        ((S_pad, C_pad), jnp.float32),         # scratch
    ]
    pool_vmem = _vmem_limit(sum(_bytes(s, d) for s, d in pool_blocks))

    y_all = pl.pallas_call(
        _psp_pool_kernel,
        out_shape=jax.ShapeDtypeStruct((N, S_pad, C_pad), jnp.bfloat16),
        grid=grid,
        in_specs=[
            pl.BlockSpec((1, T_hw, C_pad), lambda n, j: (n, j, 0)),
            pl.BlockSpec((S_pad, T_hw), lambda n, j: (0, j)),
            _const_spec((C_pad, KR_pad)),
            _const_spec((1, KR_pad)),
            _const_spec((S_pad, KR_pad)),
            _const_spec((KR_pad, C_pad)),
        ],
        out_specs=pl.BlockSpec((1, S_pad, C_pad), lambda n, j: (n, 0, 0)),
        scratch_shapes=[pltpu.VMEM((S_pad, C_pad), jnp.float32)],
        compiler_params=pltpu.CompilerParams(
            dimension_semantics=("parallel", "arbitrary"),
            vmem_limit_bytes=pool_vmem),
    )(x_bf, M_bf, W_cat_bf, shift_cat, mask_f, WF_stack_bf)

    # ---------------- pass 2: identity conv + fused upsample + bias + ReLU -----
    out_blocks = [
        ((1, T_hw, C_pad), jnp.bfloat16),      # x tile
        ((1, S_pad, C_pad), jnp.bfloat16),     # y
        ((T_hw, S_pad), jnp.bfloat16),         # U tile
        ((C_pad, C_pad), jnp.bfloat16),        # wf_x
        ((1, C_pad), jnp.float32),             # shift_f
        ((1, T_hw, C_pad), jnp.float32),       # out tile
    ]
    out_vmem = _vmem_limit(sum(_bytes(s, d) for s, d in out_blocks))

    out = pl.pallas_call(
        _psp_out_kernel,
        out_shape=jax.ShapeDtypeStruct((N, HW_pad, C_pad), jnp.float32),
        grid=grid,
        in_specs=[
            pl.BlockSpec((1, T_hw, C_pad), lambda n, j: (n, j, 0)),
            pl.BlockSpec((1, S_pad, C_pad), lambda n, j: (n, 0, 0)),
            pl.BlockSpec((T_hw, S_pad), lambda n, j: (j, 0)),
            _const_spec((C_pad, C_pad)),
            _const_spec((1, C_pad)),
        ],
        out_specs=pl.BlockSpec((1, T_hw, C_pad), lambda n, j: (n, j, 0)),
        compiler_params=pltpu.CompilerParams(
            dimension_semantics=("parallel", "parallel"),
            vmem_limit_bytes=out_vmem),
    )(x_bf, y_all, U_bf, wf_x_bf, shift_f_p)

    out = out[:, :HW, :C].reshape(N, H, W, C)
    return jnp.transpose(out, (0, 3, 1, 2))    # back to NCHW


# ---------------------------------------------------------------------------
# Pure-JAX reference (same math, no Pallas) for a sanity check
# ---------------------------------------------------------------------------
def pyramid_pooling_reference(x_nchw, params, pool_sizes, eps=1e-5):
    N, C, H, W = x_nchw.shape
    x_nhwc = jnp.transpose(x_nchw, (0, 2, 3, 1))
    feats = []
    for b, s in enumerate(pool_sizes):
        br = params["branches"][b]
        A_h = jnp.asarray(adaptive_avg_pool_matrix(H, s))
        A_w = jnp.asarray(adaptive_avg_pool_matrix(W, s))
        U_h = jnp.asarray(bilinear_upsample_matrix(H, s))
        U_w = jnp.asarray(bilinear_upsample_matrix(W, s))
        pooled = jnp.einsum('ph,nhwc->npwc', A_h, x_nhwc)
        pooled = jnp.einsum('qw,npwc->npqc', A_w, pooled)
        y = jnp.einsum('npqc,rc->npqr', pooled, br["w"])
        sb = br["gamma"] / jnp.sqrt(br["var"] + eps)
        y = jnp.maximum(y * sb + (br["beta"] - br["mean"] * sb), 0.0)
        up = jnp.einsum('hp,npqr->nhqr', U_h, y)
        up = jnp.einsum('wq,nhqr->nhwr', U_w, up)
        feats.append(up)
    feats.append(x_nhwc)
    cat = jnp.concatenate(feats, axis=-1)
    f = params["final"]
    y = jnp.einsum('nhwk,ck->nhwc', cat, f["w"]) + f["b"]
    sf = f["gamma"] / jnp.sqrt(f["var"] + eps)
    y = jnp.maximum(y * sf + (f["beta"] - f["mean"] * sf), 0.0)
    return jnp.transpose(y, (0, 3, 1, 2))


if __name__ == "__main__":
    key = jax.random.PRNGKey(0)
    k_x, k_p = jax.random.split(key)

    batch, channels, height, width = 2, 8, 16, 16
    pool_sizes = (1, 2, 3, 6)

    x = jax.random.normal(k_x, (batch, channels, height, width), jnp.float32)
    params = init_params(k_p, channels, pool_sizes)

    # Round-trip inputs / conv weights through bf16 once so the kernel (which
    # runs its MXU matmuls in bf16 with f32 accumulation) and the f32 reference
    # see the same operand values; only intermediate rounding differs.
    def _q(a):
        return a.astype(jnp.bfloat16).astype(jnp.float32)

    x = _q(x)
    for br in params["branches"]:
        br["w"] = _q(br["w"])
    params["final"]["w"] = _q(params["final"]["w"])

    out = pyramid_pooling_forward(x, params, pool_sizes, hw_tile=128)
    out = jax.block_until_ready(out)

    ref = pyramid_pooling_reference(x, params, pool_sizes)
    ref = jax.block_until_ready(ref)

    assert out.shape == (batch, channels, height, width)
    np.testing.assert_allclose(np.asarray(out), np.asarray(ref), rtol=5e-2, atol=5e-2)
    print("KERNEL_OK")
</pallas_src>

<mosaic_0001>
module attributes {stable_mosaic.version = 11 : i64} {
  func.func @_psp_pool_kernel(%arg0: i32, %arg1: i32, %arg2: memref<1x128x128xbf16, #tpu.memory_space<vmem>>, %arg3: memref<64x128xbf16, #tpu.memory_space<vmem>>, %arg4: memref<128x128xbf16, #tpu.memory_space<vmem>>, %arg5: memref<1x128xf32, #tpu.memory_space<vmem>>, %arg6: memref<64x128xf32, #tpu.memory_space<vmem>>, %arg7: memref<128x128xbf16, #tpu.memory_space<vmem>>, %arg8: memref<1x64x128xbf16, #tpu.memory_space<vmem>>, %arg9: memref<64x128xf32, #tpu.memory_space<vmem>>) attributes {dimension_semantics = [#tpu.dimension_semantics<parallel>, #tpu.dimension_semantics<arbitrary>], iteration_bounds = array<i64: 2, 2>, scalar_prefetch = 0 : i64, scratch_operands = 1 : i64, tpu.core_type = #tpu.core_type<tc>, window_params = [{transform_indices = @transform_0, window_bounds = array<i64: 1, 128, 128>}, {transform_indices = @transform_1, window_bounds = array<i64: 64, 128>}, {pipeline_mode = #tpu.pipeline_mode<synchronous>, transform_indices = @transform_2, window_bounds = array<i64: 128, 128>}, {pipeline_mode = #tpu.pipeline_mode<synchronous>, transform_indices = @transform_3, window_bounds = array<i64: 1, 128>}, {pipeline_mode = #tpu.pipeline_mode<synchronous>, transform_indices = @transform_4, window_bounds = array<i64: 64, 128>}, {pipeline_mode = #tpu.pipeline_mode<synchronous>, transform_indices = @transform_5, window_bounds = array<i64: 128, 128>}, {transform_indices = @transform_6, window_bounds = array<i64: 1, 64, 128>}]} {
    %c0_i32 = arith.constant 0 : i32
    %0 = arith.cmpi eq, %arg1, %c0_i32 : i32
    %1 = arith.extui %0 : i1 to i32
    %c0_i32_0 = arith.constant 0 : i32
    %2 = arith.cmpi ne, %1, %c0_i32_0 : i32
    scf.if %2 {
      %cst_10 = arith.constant 0.000000e+00 : f32
      %13 = vector.broadcast %cst_10 : f32 to vector<64x128xf32>
      %c0_11 = arith.constant 0 : index
      %c0_12 = arith.constant 0 : index
      %14 = vector.load %arg9[%c0_11, %c0_12] : memref<64x128xf32, #tpu.memory_space<vmem>>, vector<64x128xf32>
      tpu.vector_store %arg9[%c0_11, %c0_12], %13 {strides = array<i32>} : memref<64x128xf32, #tpu.memory_space<vmem>>, vector<64x128xf32>,
    } else {
    }
    %c0 = arith.constant 0 : index
    %c0_1 = arith.constant 0 : index
    %3 = vector.load %arg9[%c0, %c0_1] : memref<64x128xf32, #tpu.memory_space<vmem>>, vector<64x128xf32>
    %c0_2 = arith.constant 0 : index
    %c0_3 = arith.constant 0 : index
    %4 = vector.load %arg3[%c0_2, %c0_3] : memref<64x128xbf16, #tpu.memory_space<vmem>>, vector<64x128xbf16>
    %c0_4 = arith.constant 0 : index
    %c0_5 = arith.constant 0 : index
    %c0_6 = arith.constant 0 : index
    %5 = vector.load %arg2[%c0_4, %c0_5, %c0_6] : memref<1x128x128xbf16, #tpu.memory_space<vmem>>, vector<1x128x128xbf16>
    %6 = vector.shape_cast %5 : vector<1x128x128xbf16> to vector<128x128xbf16>
    %cst = arith.constant dense<0.000000e+00> : vector<64x128xf32>
    %7 = tpu.matmul %4, %6, %cst {dimension_numbers = #tpu.dot_dimension_numbers<[1], [0], [0], [1], [0, 0, 1, 1], [], []>} : vector<64x128xbf16>, vector<128x128xbf16>, vector<64x128xf32> -> vector<64x128xf32>
    %8 = arith.addf %3, %7 : vector<64x128xf32>
    %c0_7 = arith.constant 0 : index
    %c0_8 = arith.constant 0 : index
    %9 = vector.load %arg9[%c0_7, %c0_8] : memref<64x128xf32, #tpu.memory_space<vmem>>, vector<64x128xf32>
    tpu.vector_store %arg9[%c0_7, %c0_8], %8 {strides = array<i32>} : memref<64x128xf32, #tpu.memory_space<vmem>>, vector<64x128xf32>,
    %c1_i32 = arith.constant 1 : i32
    %10 = arith.cmpi eq, %arg1, %c1_i32 : i32
    %11 = arith.extui %10 : i1 to i32
    %c0_i32_9 = arith.constant 0 : i32
    %12 = arith.cmpi ne, %11, %c0_i32_9 : i32
    scf.if %12 {
      %c0_10 = arith.constant 0 : index
      %c0_11 = arith.constant 0 : index
      %13 = vector.load %arg9[%c0_10, %c0_11] : memref<64x128xf32, #tpu.memory_space<vmem>>, vector<64x128xf32>
      %14 = arith.truncf %13 : vector<64x128xf32> to vector<64x128xbf16>
      %c0_12 = arith.constant 0 : index
      %c0_13 = arith.constant 0 : index
      %15 = vector.load %arg4[%c0_12, %c0_13] : memref<128x128xbf16, #tpu.memory_space<vmem>>, vector<128x128xbf16>
      %cst_14 = arith.constant dense<0.000000e+00> : vector<64x128xf32>
      %16 = tpu.matmul %14, %15, %cst_14 {dimension_numbers = #tpu.dot_dimension_numbers<[1], [0], [0], [1], [0, 0, 1, 1], [], []>} : vector<64x128xbf16>, vector<128x128xbf16>, vector<64x128xf32> -> vector<64x128xf32>
      %c0_15 = arith.constant 0 : index
      %c0_16 = arith.constant 0 : index
      %17 = vector.load %arg5[%c0_15, %c0_16] : memref<1x128xf32, #tpu.memory_space<vmem>>, vector<1x128xf32>
      %18 = vector.broadcast %17 : vector<1x128xf32> to vector<64x128xf32>
      %19 = arith.addf %16, %18 : vector<64x128xf32>
      %cst_17 = arith.constant 0.000000e+00 : f32
      %20 = vector.broadcast %cst_17 : f32 to vector<64x128xf32>
      %21 = arith.maximumf %19, %20 : vector<64x128xf32>
      %c0_18 = arith.constant 0 : index
      %c0_19 = arith.constant 0 : index
      %22 = vector.load %arg6[%c0_18, %c0_19] : memref<64x128xf32, #tpu.memory_space<vmem>>, vector<64x128xf32>
      %23 = arith.mulf %21, %22 : vector<64x128xf32>
      %24 = arith.truncf %23 : vector<64x128xf32> to vector<64x128xbf16>
      %c0_20 = arith.constant 0 : index
      %c0_21 = arith.constant 0 : index
      %25 = vector.load %arg7[%c0_20, %c0_21] : memref<128x128xbf16, #tpu.memory_space<vmem>>, vector<128x128xbf16>
      %cst_22 = arith.constant dense<0.000000e+00> : vector<64x128xf32>
      %26 = tpu.matmul %24, %25, %cst_22 {dimension_numbers = #tpu.dot_dimension_numbers<[1], [0], [0], [1], [0, 0, 1, 1], [], []>} : vector<64x128xbf16>, vector<128x128xbf16>, vector<64x128xf32> -> vector<64x128xf32>
      %27 = arith.truncf %26 : vector<64x128xf32> to vector<64x128xbf16>
      %c0_23 = arith.constant 0 : index
      %c0_24 = arith.constant 0 : index
      %c0_25 = arith.constant 0 : index
      %28 = vector.load %arg8[%c0_23, %c0_24, %c0_25] : memref<1x64x128xbf16, #tpu.memory_space<vmem>>, vector<1x64x128xbf16>
      %29 = vector.shape_cast %28 : vector<1x64x128xbf16> to vector<64x128xbf16>
      %30 = vector.shape_cast %27 : vector<64x128xbf16> to vector<1x64x128xbf16>
      tpu.vector_store %arg8[%c0_23, %c0_24, %c0_25], %30 {strides = array<i32>} : memref<1x64x128xbf16, #tpu.memory_space<vmem>>, vector<1x64x128xbf16>,
    } else {
    }
    return
  }
  func.func @transform_0(%arg0: i32, %arg1: i32) -> (i32, i32, i32) {
    %c0_i32 = arith.constant 0 : i32
    %c0_i32_0 = arith.constant 0 : i32
    return %arg0, %arg1, %c0_i32 : i32, i32, i32
  }
  func.func @transform_1(%arg0: i32, %arg1: i32) -> (i32, i32) {
    %c0_i32 = arith.constant 0 : i32
    %c0_i32_0 = arith.constant 0 : i32
    return %c0_i32, %arg1 : i32, i32
  }
  func.func @transform_2(%arg0: i32, %arg1: i32) -> (i32, i32) {
    %c0_i32 = arith.constant 0 : i32
    %c0_i32_0 = arith.constant 0 : i32
    %c0_i32_1 = arith.constant 0 : i32
    return %c0_i32, %c0_i32_0 : i32, i32
  }
  func.func @transform_3(%arg0: i32, %arg1: i32) -> (i32, i32) {
    %c0_i32 = arith.constant 0 : i32
    %c0_i32_0 = arith.constant 0 : i32
    %c0_i32_1 = arith.constant 0 : i32
    return %c0_i32, %c0_i32_0 : i32, i32
  }
  func.func @transform_4(%arg0: i32, %arg1: i32) -> (i32, i32) {
    %c0_i32 = arith.constant 0 : i32
    %c0_i32_0 = arith.constant 0 : i32
    %c0_i32_1 = arith.constant 0 : i32
    return %c0_i32, %c0_i32_0 : i32, i32
  }
  func.func @transform_5(%arg0: i32, %arg1: i32) -> (i32, i32) {
    %c0_i32 = arith.constant 0 : i32
    %c0_i32_0 = arith.constant 0 : i32
    %c0_i32_1 = arith.constant 0 : i32
    return %c0_i32, %c0_i32_0 : i32, i32
  }
  func.func @transform_6(%arg0: i32, %arg1: i32) -> (i32, i32, i32) {
    %c0_i32 = arith.constant 0 : i32
    %c0_i32_0 = arith.constant 0 : i32
    %c0_i32_1 = arith.constant 0 : i32
    return %arg0, %c0_i32, %c0_i32_0 : i32, i32, i32
  }
}

</mosaic_0001>

<llo_original>
// kernel: tpu_custom_call.1
$region0: #{tpu_custom_call.1}
  #allocation0 [shape = 'u32[]', space=smem, size = 0x4, offset = 0x4, fixed_abs, tag = 'smem constant byte address 0x4 - core index']
  #allocation1 [shape = 'u32[72,128]{1,0:T(1,128)}', space=vmem, size = 0x9000, scoped, tag = 'internal scratch']
  #allocation2 [shape = 'f32[64,128]{1,0:T(8,128)}', space=vmem, size = 0x8000, scoped, tag = 'scratch operand']
  %s0 = inlined_call_operand.hbm [shape: bf16[2,256,128], index: 0, kind: input, shape index: {}]
  %s1 = inlined_call_operand.hbm [shape: bf16[64,256], index: 1, kind: input, shape index: {}]
  %s2 = inlined_call_operand.hbm [shape: bf16[128,128], index: 2, kind: input, shape index: {}]
  %s3 = inlined_call_operand.vmem [shape: f32[1,128], index: 3, kind: input, shape index: {}]
  %s4 = inlined_call_operand.hbm [shape: f32[64,128], index: 4, kind: input, shape index: {}]
  %s5 = inlined_call_operand.hbm [shape: bf16[128,128], index: 5, kind: input, shape index: {}]
  %s6 = inlined_call_operand.hbm [shape: bf16[2,64,128], index: 6, kind: output, shape index: {}]
  %s7 = sld [smem:[#allocation0]]
  $region85: #{tpu_custom_call.1} parent=0
    _
  %s9 = ssub.s32 1, %s7
  %s10 = scalar_select 0, %s9, %s7
  $region1: #{tpu_custom_call.1} parent=0
    #allocation3 [shape = 'u8[65536]{0}', space=vmem, size = 0x10000, scoped, tag = 'input window, operand 0']
    #allocation4 [shape = 's32[2]{0}', space=sflag, size = 0x8, scoped, tag = 'scoped memory for tpu_custom_call.1']
    #allocation5 [shape = 's32[2]{0}', space=sflag, size = 0x8, scoped, tag = 'scoped memory for tpu_custom_call.1']
    #allocation6 [shape = 'u8[32768]{0}', space=vmem, size = 0x8000, scoped, tag = 'input window, operand 1']
    #allocation7 [shape = 's32[2]{0}', space=sflag, size = 0x8, scoped, tag = 'scoped memory for tpu_custom_call.1']
    #allocation8 [shape = 'u8[32768]{0}', space=vmem, size = 0x8000, scoped, tag = 'input window, operand 2, single buffered']
    #allocation9 [shape = 'u8[32768]{0}', space=vmem, size = 0x8000, scoped, tag = 'input window, operand 4, single buffered']
    #allocation10 [shape = 's32[1]{0}', space=sflag, size = 0x4, scoped, tag = 'scoped memory for tpu_custom_call.1']
    #allocation11 [shape = 'u8[32768]{0}', space=vmem, size = 0x8000, scoped, tag = 'input window, operand 5, single buffered']
    #allocation12 [shape = 'u8[32768]{0}', space=vmem, size = 0x8000, scoped, tag = 'output window, operand 0']
    %11 = vsyncpa [#allocation4], 0
    %s12 = scalar_lea.sflag [#allocation4], 1
    %13 = vsyncpa %s12, 0
    %14 = vsyncpa [#allocation7], 0
    %s15 = scalar_lea.sflag [#allocation7], 1
    %16 = vsyncpa %s15, 0
    %17 = vsyncpa [#allocation10], 0
    %18 = vsyncpa [#allocation5], 0
    %s19 = scalar_lea.sflag [#allocation5], 1
    %20 = vsyncpa %s19, 0
    loop: start=0, step=1, limit=6
    $region2: #{tpu_custom_call.1} parent=1 // loop_pre_header
      _
    $region3: #{tpu_custom_call.1} parent=1 // loop_header
      %s22 = sphi 0, %s26
      %p23 = scmp.ge.s32.totalorder %s22, 6
      %s29 = sphi 0, %s41
      %s30 = sphi 0, %s37
      %s31 = sphi 0, %s29
      %s32 = sphi 0, %s30
      %s33 = sphi 0, %s31
      %s34 = sphi 0, %s32
      %s46 = sphi 0, %s48
      %s49 = sphi 0, %s46
      %s50 = sphi 0, %s49
      %s66 = sphi 0, %s50
      %s72 = sphi 0, %s74
      %s75 = sphi 0, %s72
      %s76 = sphi 0, %s75
      %s92 = sphi 0, %s76
      %s96 = sphi 0, %s96
      %s98 = sphi 0, %s96
      %s99 = sphi 0, %s98
      %s113 = sphi 0, %s99
      %s117 = sphi 0, %s117
      %s119 = sphi 0, %s117
      %s120 = sphi 0, %s119
      %s134 = sphi 0, %s120
      %s138 = sphi 0, %s138
      %s140 = sphi 0, %s138
      %s141 = sphi 0, %s140
      %s155 = sphi 0, %s141
      %s159 = sphi 0, %s159
      %s161 = sphi 0, %s159
      %s162 = sphi 0, %s161
      %s176 = sphi 0, %s162
      %s182 = sphi 0, %s184
      %s185 = sphi 0, %s182
      %s186 = sphi 0, %s185
      %s202 = sphi 0, %s186
    $region4: #{tpu_custom_call.1} parent=1 // loop_header_branch
      %25 = sbr.rel (%p23) target = $region8
    $region5: #{tpu_custom_call.1} parent=1 // loop_body
      %s27 = ssub.s32 %s22, 1
      %s28 = ssub.s32 %s22, 2
      %s35 = sadd.s32 1, %s30
      %p36 = scmp.ge.s32.totalorder %s35, 2
      %s37 = scalar_select %p36, 0, %s35
      %s38 = sadd.s32 1, %s29
      %s39 = scalar_select %p36, %s38, %s29
      %p40 = scmp.ge.s32.totalorder %s39, 2
      %s41 = scalar_select %p40, 0, %s39
      %s42 = ssub.s32 %s29, %s41
      %s43 = ssub.s32 %s30, %s37
      %s44 = sor.u32 %s42, %s43
      %p45 = scmp.eq.s32.totalorder %s44, 0
      %s47 = sadd.s32 %s46, 1
      %s48 = scalar_select %p45, %s46, %s47
      %p51 = pneg %p45
      %p52 = scmp.eq.s32.totalorder %s22, 3
      %p53 = por %p51, %p52
      %p54 = scmp.ne.s32.totalorder %s46, %s49
      %p55 = scmp.eq.s32.totalorder %s22, 0
      %p56 = por %p54, %p55
      %p57 = scmp.ne.s32.totalorder %s46, %s49
      %p58 = scmp.eq.s32.totalorder %s27, 3
      %p59 = por %p57, %p58
      %p60 = scmp.ne.s32.totalorder %s49, %s50
      %p61 = scmp.eq.s32.totalorder %s27, 0
      %p62 = por %p60, %p61
      %p63 = scmp.ne.s32.totalorder %s49, %s50
      %p64 = scmp.eq.s32.totalorder %s28, 3
      %p65 = por %p63, %p64
      %p67 = scmp.ne.s32.totalorder %s50, %s66
      %p68 = scmp.eq.s32.totalorder %s28, 0
      %p69 = por %p67, %p68
      %s70 = ssub.s32 %s30, %s37
      %p71 = scmp.eq.s32.totalorder %s70, 0
      %s73 = sadd.s32 %s72, 1
      %s74 = scalar_select %p71, %s72, %s73
      %p77 = pneg %p71
      %p78 = scmp.eq.s32.totalorder %s22, 3
      %p79 = por %p77, %p78
      %p80 = scmp.ne.s32.totalorder %s72, %s75
      %p81 = scmp.eq.s32.totalorder %s22, 0
      %p82 = por %p80, %p81
      %p83 = scmp.ne.s32.totalorder %s72, %s75
      %p84 = scmp.eq.s32.totalorder %s27, 3
      %p85 = por %p83, %p84
      %p86 = scmp.ne.s32.totalorder %s75, %s76
      %p87 = scmp.eq.s32.totalorder %s27, 0
      %p88 = por %p86, %p87
      %p89 = scmp.ne.s32.totalorder %s75, %s76
      %p90 = scmp.eq.s32.totalorder %s28, 3
      %p91 = por %p89, %p90
      %p93 = scmp.ne.s32.totalorder %s76, %s92
      %p94 = scmp.eq.s32.totalorder %s28, 0
      %p95 = por %p93, %p94
      %s97 = sadd.s32 %s96, 1
      %p100 = scmp.eq.s32.totalorder %s22, 3
      %p101 = scmp.ne.s32.totalorder %s96, %s98
      %p102 = scmp.eq.s32.totalorder %s22, 0
      %p103 = por %p101, %p102
      %p104 = scmp.ne.s32.totalorder %s96, %s98
      %p105 = scmp.eq.s32.totalorder %s27, 3
      %p106 = por %p104, %p105
      %p107 = scmp.ne.s32.totalorder %s98, %s99
      %p108 = scmp.eq.s32.totalorder %s27, 0
      %p109 = por %p107, %p108
      %p110 = scmp.ne.s32.totalorder %s98, %s99
      %p111 = scmp.eq.s32.totalorder %s28, 3
      %p112 = por %p110, %p111
      %p114 = scmp.ne.s32.totalorder %s99, %s113
      %p115 = scmp.eq.s32.totalorder %s28, 0
      %p116 = por %p114, %p115
      %s118 = sadd.s32 %s117, 1
      %p121 = scmp.eq.s32.totalorder %s22, 3
      %p122 = scmp.ne.s32.totalorder %s117, %s119
      %p123 = scmp.eq.s32.totalorder %s22, 0
      %p124 = por %p122, %p123
      %p125 = scmp.ne.s32.totalorder %s117, %s119
      %p126 = scmp.eq.s32.totalorder %s27, 3
      %p127 = por %p125, %p126
      %p128 = scmp.ne.s32.totalorder %s119, %s120
      %p129 = scmp.eq.s32.totalorder %s27, 0
      %p130 = por %p128, %p129
      %p131 = scmp.ne.s32.totalorder %s119, %s120
      %p132 = scmp.eq.s32.totalorder %s28, 3
      %p133 = por %p131, %p132
      %p135 = scmp.ne.s32.totalorder %s120, %s134
      %p136 = scmp.eq.s32.totalorder %s28, 0
      %p137 = por %p135, %p136
      %s139 = sadd.s32 %s138, 1
      %p142 = scmp.eq.s32.totalorder %s22, 3
      %p143 = scmp.ne.s32.totalorder %s138, %s140
      %p144 = scmp.eq.s32.totalorder %s22, 0
      %p145 = por %p143, %p144
      %p146 = scmp.ne.s32.totalorder %s138, %s140
      %p147 = scmp.eq.s32.totalorder %s27, 3
      %p148 = por %p146, %p147
      %p149 = scmp.ne.s32.totalorder %s140, %s141
      %p150 = scmp.eq.s32.totalorder %s27, 0
      %p151 = por %p149, %p150
      %p152 = scmp.ne.s32.totalorder %s140, %s141
      %p153 = scmp.eq.s32.totalorder %s28, 3
      %p154 = por %p152, %p153
      %p156 = scmp.ne.s32.totalorder %s141, %s155
      %p157 = scmp.eq.s32.totalorder %s28, 0
      %p158 = por %p156, %p157
      %s160 = sadd.s32 %s159, 1
      %p163 = scmp.eq.s32.totalorder %s22, 3
      %p164 = scmp.ne.s32.totalorder %s159, %s161
      %p165 = scmp.eq.s32.totalorder %s22, 0
      %p166 = por %p164, %p165
      %p167 = scmp.ne.s32.totalorder %s159, %s161
      %p168 = scmp.eq.s32.totalorder %s27, 3
      %p169 = por %p167, %p168
      %p170 = scmp.ne.s32.totalorder %s161, %s162
      %p171 = scmp.eq.s32.totalorder %s27, 0
      %p172 = por %p170, %p171
      %p173 = scmp.ne.s32.totalorder %s161, %s162
      %p174 = scmp.eq.s32.totalorder %s28, 3
      %p175 = por %p173, %p174
      %p177 = scmp.ne.s32.totalorder %s162, %s176
      %p178 = scmp.eq.s32.totalorder %s28, 0
      %p179 = por %p177, %p178
      %s180 = ssub.s32 %s29, %s41
      %p181 = scmp.eq.s32.totalorder %s180, 0
      %s183 = sadd.s32 %s182, 1
      %s184 = scalar_select %p181, %s182, %s183
      %p187 = pneg %p181
      %p188 = scmp.eq.s32.totalorder %s22, 3
      %p189 = por %p187, %p188
      %p190 = scmp.ne.s32.totalorder %s182, %s185
      %p191 = scmp.eq.s32.totalorder %s22, 0
      %p192 = por %p190, %p191
      %p193 = scmp.ne.s32.totalorder %s182, %s185
      %p194 = scmp.eq.s32.totalorder %s27, 3
      %p195 = por %p193, %p194
      %p196 = scmp.ne.s32.totalorder %s185, %s186
      %p197 = scmp.eq.s32.totalorder %s27, 0
      %p198 = por %p196, %p197
      %p199 = scmp.ne.s32.totalorder %s185, %s186
      %p200 = scmp.eq.s32.totalorder %s28, 3
      %p201 = por %p199, %p200
      %p203 = scmp.ne.s32.totalorder %s186, %s202
      %p204 = scmp.eq.s32.totalorder %s28, 0
      %p205 = por %p203, %p204
      %p206 = scmp.le.s32.totalorder 1, %s22
      %p207 = scmp.lt.s32.totalorder %s22, 5
      %p208 = pnand %p206, %p207
      %p209 = pneg %p208
      // Predicated region
      $region9: #{tpu_custom_call.1} parent=5 // pred_check
        _
      $region10: #{tpu_custom_call.1} parent=5 // pred_check_branch
        %211 = sbr.rel (%p208) target = $region12
      $region11: #{tpu_custom_call.1} parent=5 // pred_region
        %s212 = ssub.s32 %s22, 1
        // Predicated region
        $region13: #{tpu_custom_call.1} parent=11 // pred_check
          %p213 = pneg %p109
        $region14: #{tpu_custom_call.1} parent=11 // pred_check_branch
          %215 = sbr.rel (%p213) target = $region16
        $region15: #{tpu_custom_call.1} parent=11 // pred_region
          %217 = vsyncadd [#allocation7], 0
          %s218 = sshll.u32 %s2, 4
          %s219 = int_to_ptr.hbm [resolvable:$true] %s218
          %s220 = sshll.u32 [#allocation8], 4
          %s221 = int_to_ptr.vmem [resolvable:$true] %s220
          %226 = dma.hbm_to_vmem [thread:$0]  %s219, 1024, %s221, [#allocation7], 64, 64, 4
        $region16: #{tpu_custom_call.1} parent=11 // pred_fallthru
          _
        // Predicated region
        $region17: #{tpu_custom_call.1} parent=11 // pred_check
          %p227 = pneg %p130
        $region18: #{tpu_custom_call.1} parent=11 // pred_check_branch
          %229 = sbr.rel (%p227) target = $region20
        $region19: #{tpu_custom_call.1} parent=11 // pred_region
          _
        $region20: #{tpu_custom_call.1} parent=11 // pred_fallthru
          _
        // Predicated region
        $region21: #{tpu_custom_call.1} parent=11 // pred_check
          %p230 = pneg %p151
        $region22: #{tpu_custom_call.1} parent=11 // pred_check_branch
          %232 = sbr.rel (%p230) target = $region24
        $region23: #{tpu_custom_call.1} parent=11 // pred_region
          %234 = vsyncadd [#allocation10], 0
          %s235 = sshll.u32 %s4, 4
          %s236 = int_to_ptr.hbm [resolvable:$true] %s235
          %s237 = sshll.u32 [#allocation9], 4
          %s238 = int_to_ptr.vmem [resolvable:$true] %s237
          %243 = dma.hbm_to_vmem [thread:$0]  %s236, 1024, %s238, [#allocation10], 128, 128, 8
        $region24: #{tpu_custom_call.1} parent=11 // pred_fallthru
          _
        // Predicated region
        $region25: #{tpu_custom_call.1} parent=11 // pred_check
          %p244 = pneg %p172
        $region26: #{tpu_custom_call.1} parent=11 // pred_check_branch
          %246 = sbr.rel (%p244) target = $region28
        $region27: #{tpu_custom_call.1} parent=11 // pred_region
          %248 = vsyncadd [#allocation10], 0
          %s249 = sshll.u32 %s5, 4
          %s250 = int_to_ptr.hbm [resolvable:$true] %s249
          %s251 = sshll.u32 [#allocation11], 4
          %s252 = int_to_ptr.vmem [resolvable:$true] %s251
          %257 = dma.hbm_to_vmem [thread:$0]  %s250, 1024, %s252, [#allocation10], 64, 64, 4
        $region28: #{tpu_custom_call.1} parent=11 // pred_fallthru
          _
      $region12: #{tpu_custom_call.1} parent=5 // pred_fallthru
        _
      %p258 = scmp.lt.s32.totalorder %s22, 4
      // Predicated region
      $region29: #{tpu_custom_call.1} parent=5 // pred_check
        %p259 = pneg %p258
      $region30: #{tpu_custom_call.1} parent=5 // pred_check_branch
        %261 = sbr.rel (%p259) target = $region32
      $region31: #{tpu_custom_call.1} parent=5 // pred_region
        // Predicated region
        $region33: #{tpu_custom_call.1} parent=31 // pred_check
          %p262 = pneg %p56
        $region34: #{tpu_custom_call.1} parent=31 // pred_check_branch
          %264 = sbr.rel (%p262) target = $region36
        $region35: #{tpu_custom_call.1} parent=31 // pred_region
          %s265 = sand.u32 %s46, 1
          %s266 = scalar_lea.sflag [#allocation4], %s265
          %s267 = sand.u32 %s46, 1
          %s268 = smul.addr %s267, 64
          %s269 = scalar_lea.vmem [#allocation3], %s268
          %s270 = smul.u32 16, %s30
          %272 = vsyncadd %s266, 0
          %s273 = smul.addr %s29, 32
          %s274 = sadd.s32 %s270, %s273
          %s275 = smul.addr %s274, 4
          %s276 = scalar_lea.hbm %s0, %s275
          %s277 = sshll.u32 %s276, 4
          %s278 = int_to_ptr.hbm [resolvable:$true] %s277
          %s279 = sshll.u32 %s269, 4
          %s280 = int_to_ptr.vmem [resolvable:$true] %s279
          %285 = dma.hbm_to_vmem [thread:$0]  %s278, 1024, %s280, %s266, 64, 64, 4
        $region36: #{tpu_custom_call.1} parent=31 // pred_fallthru
          _
        // Predicated region
        $region37: #{tpu_custom_call.1} parent=31 // pred_check
          %p286 = pneg %p82
        $region38: #{tpu_custom_call.1} parent=31 // pred_check_branch
          %288 = sbr.rel (%p286) target = $region40
        $region39: #{tpu_custom_call.1} parent=31 // pred_region
          %s289 = sand.u32 %s22, 1
          %s290 = scalar_lea.sflag [#allocation7], %s289
          %s291 = sand.u32 %s72, 1
          %s292 = smul.addr %s291, 32
          %s293 = scalar_lea.vmem [#allocation6], %s292
          %295 = vsyncadd %s290, 0
          %s296 = smul.addr %s30, 4
          %s297 = scalar_lea.hbm %s1, %s296
          %s298 = sshll.u32 %s297, 4
          %s299 = int_to_ptr.hbm [resolvable:$true] %s298
          %s300 = sshll.u32 %s293, 4
          %s301 = int_to_ptr.vmem [resolvable:$true] %s300
          %306 = dma.hbm_to_vmem [thread:$0]  %s299, 512, %s301, %s290, 128, 64, 4
        $region40: #{tpu_custom_call.1} parent=31 // pred_fallthru
          _
      $region32: #{tpu_custom_call.1} parent=5 // pred_fallthru
        _
      %p307 = scmp.le.s32.totalorder 1, %s22
      %p308 = scmp.lt.s32.totalorder %s22, 5
      %p309 = pnand %p307, %p308
      %p310 = pneg %p309
      // Predicated region
      $region41: #{tpu_custom_call.1} parent=5 // pred_check
        _
      $region42: #{tpu_custom_call.1} parent=5 // pred_check_branch
        %312 = sbr.rel (%p309) target = $region44
      $region43: #{tpu_custom_call.1} parent=5 // pred_region
        %s313 = ssub.s32 %s22, 1
        %s314 = sand.u32 %s49, 1
        %s315 = scalar_lea.sflag [#allocation4], %s314
        %s316 = sand.u32 %s49, 1
        %s317 = smul.addr %s316, 64
        %s318 = scalar_lea.vmem [#allocation3], %s317
        // Predicated region
        $region45: #{tpu_custom_call.1} parent=43 // pred_check
          %p319 = pneg %p62
        $region46: #{tpu_custom_call.1} parent=43 // pred_check_branch
          %321 = sbr.rel (%p319) target = $region48
        $region47: #{tpu_custom_call.1} parent=43 // pred_region
          %323 = dma.done %s315, 1024
        $region48: #{tpu_custom_call.1} parent=43 // pred_fallthru
          _
        %s324 = sand.u32 %s27, 1
        %s325 = scalar_lea.sflag [#allocation7], %s324
        %s326 = sand.u32 %s75, 1
        %s327 = smul.addr %s326, 32
        %s328 = scalar_lea.vmem [#allocation6], %s327
        // Predicated region
        $region49: #{tpu_custom_call.1} parent=43 // pred_check
          %p329 = pneg %p88
        $region50: #{tpu_custom_call.1} parent=43 // pred_check_branch
          %331 = sbr.rel (%p329) target = $region52
        $region51: #{tpu_custom_call.1} parent=43 // pred_region
          %333 = dma.done %s325, 512
        $region52: #{tpu_custom_call.1} parent=43 // pred_fallthru
          _
        // Predicated region
        $region53: #{tpu_custom_call.1} parent=43 // pred_check
          %p334 = pneg %p109
        $region54: #{tpu_custom_call.1} parent=43 // pred_check_branch
          %336 = sbr.rel (%p334) target = $region56
        $region55: #{tpu_custom_call.1} parent=43 // pred_region
          %338 = dma.done [#allocation7], 1024
        $region56: #{tpu_custom_call.1} parent=43 // pred_fallthru
          _
        // Predicated region
        $region57: #{tpu_custom_call.1} parent=43 // pred_check
          %p339 = pneg %p151
        $region58: #{tpu_custom_call.1} parent=43 // pred_check_branch
          %341 = sbr.rel (%p339) target = $region60
        $region59: #{tpu_custom_call.1} parent=43 // pred_region
          %343 = dma.done [#allocation10], 1024
        $region60: #{tpu_custom_call.1} parent=43 // pred_fallthru
          _
        // Predicated region
        $region61: #{tpu_custom_call.1} parent=43 // pred_check
          %p344 = pneg %p172
        $region62: #{tpu_custom_call.1} parent=43 // pred_check_branch
          %346 = sbr.rel (%p344) target = $region64
        $region63: #{tpu_custom_call.1} parent=43 // pred_region
          %348 = dma.done [#allocation10], 1024
        $region64: #{tpu_custom_call.1} parent=43 // pred_fallthru
          _
        %s349 = sand.u32 %s49, 1
        %s350 = scalar_lea.sflag [#allocation4], %s349
        %s351 = sand.u32 %s49, 1
        %s352 = smul.addr %s351, 64
        %s353 = scalar_lea.vmem [#allocation3], %s352
        %p354 = pneg %p62
        %p355 = pneg %p59
        %s356 = sand.u32 %s27, 1
        %s357 = scalar_lea.sflag [#allocation7], %s356
        %s358 = sand.u32 %s75, 1
        %s359 = smul.addr %s358, 32
        %s360 = scalar_lea.vmem [#allocation6], %s359
        %p361 = pneg %p88
        %p362 = pneg %p85
        %p363 = pneg %p109
        %p364 = pneg %p106
        %p365 = pneg %p130
        %p366 = pneg %p127
        %p367 = pneg %p151
        %p368 = pneg %p148
        %p369 = pneg %p172
        %p370 = pneg %p169
        %p371 = pneg %p198
        %p372 = pneg %p195
        %s373 = sand.u32 %s185, 1
        %s374 = scalar_lea.sflag [#allocation5], %s373
        %s375 = sand.u32 %s185, 1
        %s376 = smul.addr %s375, 32
        %s377 = scalar_lea.vmem [#allocation12], %s376
        %s378 = smul.u32 16, %s32
        %p379 = scmp.eq.s32.totalorder %s32, 0
        // Predicated region
        $region65: #{tpu_custom_call.1} parent=43 // pred_check
          %p380 = pneg %p379
        $region66: #{tpu_custom_call.1} parent=43 // pred_check_branch
          %382 = sbr.rel (%p380) target = $region68
        $region67: #{tpu_custom_call.1} parent=43 // pred_region
          %383 = vst [vmem:[#allocation2] sm:$0xff] 0.0
          %384 = vst [vmem:[#allocation2 + $0x8] sm:$0xff] 0.0
          %385 = vst [vmem:[#allocation2 + $0x10] sm:$0xff] 0.0
          %386 = vst [vmem:[#allocation2 + $0x18] sm:$0xff] 0.0
          %387 = vst [vmem:[#allocation2 + $0x20] sm:$0xff] 0.0
          %388 = vst [vmem:[#allocation2 + $0x28] sm:$0xff] 0.0
          %389 = vst [vmem:[#allocation2 + $0x30] sm:$0xff] 0.0
          %390 = vst [vmem:[#allocation2 + $0x38] sm:$0xff] 0.0
        $region68: #{tpu_custom_call.1} parent=43 // pred_fallthru
          _
        %v391 = vld [vmem:[#allocation2] sm:$0xff]
        %v392 = vld [vmem:[#allocation2 + $0x8] sm:$0xff]
        %v393 = vld [vmem:[#allocation2 + $0x10] sm:$0xff]
        %v394 = vld [vmem:[#allocation2 + $0x18] sm:$0xff]
        %v395 = vld [vmem:[#allocation2 + $0x20] sm:$0xff]
        %v396 = vld [vmem:[#allocation2 + $0x28] sm:$0xff]
        %v397 = vld [vmem:[#allocation2 + $0x30] sm:$0xff]
        %v398 = vld [vmem:[#allocation2 + $0x38] sm:$0xff]
        %v399 = vld [vmem:[%s328] sm:$0xf]
        %v400 = vld [vmem:[%s328 + $0x4] sm:$0xf]
        %v401 = vld [vmem:[%s328 + $0x8] sm:$0xf]
        %v402 = vld [vmem:[%s328 + $0xc] sm:$0xf]
        %v403 = vld [vmem:[%s328 + $0x10] sm:$0xf]
        %v404 = vld [vmem:[%s328 + $0x14] sm:$0xf]
        %v405 = vld [vmem:[%s328 + $0x18] sm:$0xf]
        %v406 = vld [vmem:[%s328 + $0x1c] sm:$0xf]
        %v407 = vld [vmem:[%s318] sm:$0xf]
        %v408 = vld [vmem:[%s318 + $0x4] sm:$0xf]
        %v409 = vld [vmem:[%s318 + $0x8] sm:$0xf]
        %v410 = vld [vmem:[%s318 + $0xc] sm:$0xf]
        %v411 = vld [vmem:[%s318 + $0x10] sm:$0xf]
        %v412 = vld [vmem:[%s318 + $0x14] sm:$0xf]
        %v413 = vld [vmem:[%s318 + $0x18] sm:$0xf]
        %v414 = vld [vmem:[%s318 + $0x1c] sm:$0xf]
        %v415 = vld [vmem:[%s318 + $0x20] sm:$0xf]
        %v416 = vld [vmem:[%s318 + $0x24] sm:$0xf]
        %v417 = vld [vmem:[%s318 + $0x28] sm:$0xf]
        %v418 = vld [vmem:[%s318 + $0x2c] sm:$0xf]
        %v419 = vld [vmem:[%s318 + $0x30] sm:$0xf]
        %v420 = vld [vmem:[%s318 + $0x34] sm:$0xf]
        %v421 = vld [vmem:[%s318 + $0x38] sm:$0xf]
        %v422 = vld [vmem:[%s318 + $0x3c] sm:$0xf]
        %v431 = vunpack.c.l.b16 %v399
        %v432 = vunpack.c.l.b16 %v400
        %v433 = vunpack.c.l.b16 %v401
        %v434 = vunpack.c.l.b16 %v402
        %v435 = vunpack.c.l.b16 %v403
        %v436 = vunpack.c.l.b16 %v404
        %v437 = vunpack.c.l.b16 %v405
        %v438 = vunpack.c.l.b16 %v406
        %v439 = vpack.c.b16 %v432, %v431
        %v440 = vpack.c.b16 %v434, %v433
        %v441 = vpack.c.b16 %v436, %v435
        %v442 = vpack.c.b16 %v438, %v437
        %v463 = vunpack.c.l.b16 %v407
        %v464 = vunpack.c.l.b16 %v408
        %v465 = vunpack.c.l.b16 %v409
        %v466 = vunpack.c.l.b16 %v410
        %v467 = vunpack.c.l.b16 %v411
        %v468 = vunpack.c.l.b16 %v412
        %v469 = vunpack.c.l.b16 %v413
        %v470 = vunpack.c.l.b16 %v414
        %v471 = vunpack.c.l.b16 %v415
        %v472 = vunpack.c.l.b16 %v416
        %v473 = vunpack.c.l.b16 %v417
        %v474 = vunpack.c.l.b16 %v418
        %v475 = vunpack.c.l.b16 %v419
        %v476 = vunpack.c.l.b16 %v420
        %v477 = vunpack.c.l.b16 %v421
        %v478 = vunpack.c.l.b16 %v422
        %v479 = vpack.c.b16 %v464, %v463
        %v480 = vpack.c.b16 %v466, %v465
        %v481 = vpack.c.b16 %v468, %v467
        %v482 = vpack.c.b16 %v470, %v469
        %v483 = vpack.c.b16 %v472, %v471
        %v484 = vpack.c.b16 %v474, %v473
        %v485 = vpack.c.b16 %v476, %v475
        %v486 = vpack.c.b16 %v478, %v477
        %495 = vmatpush.bf16.msra.mxu0 %v486
        %496 = vmatpush.bf16.msra.mxu0 %v485
        %497 = vmatpush.bf16.msra.mxu0 %v484
        %498 = vmatpush.bf16.msra.mxu0 %v483
        %499 = vmatpush.bf16.msra.mxu0 %v482
        %500 = vmatpush.bf16.msra.mxu0 %v481
        %501 = vmatpush.bf16.msra.mxu0 %v480
        %502 = vmatpush.bf16.msra.mxu0 %v479
        %503 = vmatmul.bf16.gmra.mxu0 %v439
        %v504 = vpop.f32.mrf.mxu0
        %v505 = vadd.f32 0.0, %v504
        %v506 = vpop.f32.mrf.mxu0
        %v507 = vadd.f32 0.0, %v506
        %508 = vmatmul.bf16.gmra.mxu0 %v440
        %v509 = vpop.f32.mrf.mxu0
        %v510 = vadd.f32 0.0, %v509
        %v511 = vpop.f32.mrf.mxu0
        %v512 = vadd.f32 0.0, %v511
        %513 = vmatmul.bf16.gmra.mxu0 %v441
        %v514 = vpop.f32.mrf.mxu0
        %v515 = vadd.f32 0.0, %v514
        %v516 = vpop.f32.mrf.mxu0
        %v517 = vadd.f32 0.0, %v516
        %518 = vmatmul.bf16.gmra.mxu0 %v442
        %v519 = vpop.f32.mrf.mxu0
        %v520 = vadd.f32 0.0, %v519
        %v521 = vpop.f32.mrf.mxu0
        %v522 = vadd.f32 0.0, %v521
        %523 = vdwg.mxu0
        %v524 = vadd.f32 %v391, %v505
        %v525 = vadd.f32 %v392, %v507
        %v526 = vadd.f32 %v393, %v510
        %v527 = vadd.f32 %v394, %v512
        %v528 = vadd.f32 %v395, %v515
        %v529 = vadd.f32 %v396, %v517
        %v530 = vadd.f32 %v397, %v520
        %v531 = vadd.f32 %v398, %v522
        %532 = vst [vmem:[#allocation2] sm:$0xff] %v524
        %533 = vst [vmem:[#allocation2 + $0x8] sm:$0xff] %v525
        %534 = vst [vmem:[#allocation2 + $0x10] sm:$0xff] %v526
        %535 = vst [vmem:[#allocation2 + $0x18] sm:$0xff] %v527
        %536 = vst [vmem:[#allocation2 + $0x20] sm:$0xff] %v528
        %537 = vst [vmem:[#allocation2 + $0x28] sm:$0xff] %v529
        %538 = vst [vmem:[#allocation2 + $0x30] sm:$0xff] %v530
        %539 = vst [vmem:[#allocation2 + $0x38] sm:$0xff] %v531
        %p540 = scmp.eq.s32.totalorder %s32, 1
        // Predicated region
        $region69: #{tpu_custom_call.1} parent=43 // pred_check
          %p541 = pneg %p540
        $region70: #{tpu_custom_call.1} parent=43 // pred_check_branch
          %543 = sbr.rel (%p541) target = $region72
        $region71: #{tpu_custom_call.1} parent=43 // pred_region
          %v544 = vld [vmem:[#allocation2] sm:$0xff]
          %v545 = vld [vmem:[#allocation2 + $0x8] sm:$0xff]
          %v546 = vld [vmem:[#allocation2 + $0x10] sm:$0xff]
          %v547 = vld [vmem:[#allocation2 + $0x18] sm:$0xff]
          %v548 = vld [vmem:[#allocation2 + $0x20] sm:$0xff]
          %v549 = vld [vmem:[#allocation2 + $0x28] sm:$0xff]
          %v550 = vld [vmem:[#allocation2 + $0x30] sm:$0xff]
          %v551 = vld [vmem:[#allocation2 + $0x38] sm:$0xff]
          %v552 = vpack.c.bf16 %v545, %v544
          %v553 = vpack.c.bf16 %v547, %v546
          %v554 = vpack.c.bf16 %v549, %v548
          %v555 = vpack.c.bf16 %v551, %v550
          %v556 = vld [vmem:[#allocation8] sm:$0xf]
          %v557 = vld [vmem:[#allocation8 + $0x4] sm:$0xf]
          %v558 = vld [vmem:[#allocation8 + $0x8] sm:$0xf]
          %v559 = vld [vmem:[#allocation8 + $0xc] sm:$0xf]
          %v560 = vld [vmem:[#allocation8 + $0x10] sm:$0xf]
          %v561 = vld [vmem:[#allocation8 + $0x14] sm:$0xf]
          %v562 = vld [vmem:[#allocation8 + $0x18] sm:$0xf]
          %v563 = vld [vmem:[#allocation8 + $0x1c] sm:$0xf]
          %v564 = vld [vmem:[#allocation8 + $0x20] sm:$0xf]
          %v565 = vld [vmem:[#allocation8 + $0x24] sm:$0xf]
          %v566 = vld [vmem:[#allocation8 + $0x28] sm:$0xf]
          %v567 = vld [vmem:[#allocation8 + $0x2c] sm:$0xf]
          %v568 = vld [vmem:[#allocation8 + $0x30] sm:$0xf]
          %v569 = vld [vmem:[#allocation8 + $0x34] sm:$0xf]
          %v570 = vld [vmem:[#allocation8 + $0x38] sm:$0xf]
          %v571 = vld [vmem:[#allocation8 + $0x3c] sm:$0xf]
          %v572 = vld [vmem:[%s3] sm:$0x1]
          %v574 = vperm.slane %v572, 0
          %v592 = vunpack.c.l.b16 %v556
          %v593 = vunpack.c.l.b16 %v557
          %v594 = vunpack.c.l.b16 %v558
          %v595 = vunpack.c.l.b16 %v559
          %v596 = vunpack.c.l.b16 %v560
          %v597 = vunpack.c.l.b16 %v561
          %v598 = vunpack.c.l.b16 %v562
          %v599 = vunpack.c.l.b16 %v563
          %v600 = vunpack.c.l.b16 %v564
          %v601 = vunpack.c.l.b16 %v565
          %v602 = vunpack.c.l.b16 %v566
          %v603 = vunpack.c.l.b16 %v567
          %v604 = vunpack.c.l.b16 %v568
          %v605 = vunpack.c.l.b16 %v569
          %v606 = vunpack.c.l.b16 %v570
          %v607 = vunpack.c.l.b16 %v571
          %v608 = vpack.c.b16 %v593, %v592
          %v609 = vpack.c.b16 %v595, %v594
          %v610 = vpack.c.b16 %v597, %v596
          %v611 = vpack.c.b16 %v599, %v598
          %v612 = vpack.c.b16 %v601, %v600
          %v613 = vpack.c.b16 %v603, %v602
          %v614 = vpack.c.b16 %v605, %v604
          %v615 = vpack.c.b16 %v607, %v606
          %624 = vmatpush.bf16.msra.mxu0 %v615
          %625 = vmatpush.bf16.msra.mxu0 %v614
          %626 = vmatpush.bf16.msra.mxu0 %v613
          %627 = vmatpush.bf16.msra.mxu0 %v612
          %628 = vmatpush.bf16.msra.mxu0 %v611
          %629 = vmatpush.bf16.msra.mxu0 %v610
          %630 = vmatpush.bf16.msra.mxu0 %v609
          %631 = vmatpush.bf16.msra.mxu0 %v608
          %632 = vmatmul.bf16.gmra.mxu0 %v552
          %v633 = vpop.f32.mrf.mxu0
          %v634 = vadd.f32 %v574, %v633
          %v635 = vpop.f32.mrf.mxu0
          %v636 = vadd.f32 %v574, %v635
          %637 = vmatmul.bf16.gmra.mxu0 %v553
          %v638 = vpop.f32.mrf.mxu0
          %v639 = vadd.f32 %v574, %v638
          %v640 = vpop.f32.mrf.mxu0
          %v641 = vadd.f32 %v574, %v640
          %642 = vmatmul.bf16.gmra.mxu0 %v554
          %v643 = vpop.f32.mrf.mxu0
          %v644 = vadd.f32 %v574, %v643
          %v645 = vpop.f32.mrf.mxu0
          %v646 = vadd.f32 %v574, %v645
          %647 = vmatmul.bf16.gmra.mxu0 %v555
          %v648 = vpop.f32.mrf.mxu0
          %v649 = vadd.f32 %v574, %v648
          %v650 = vpop.f32.mrf.mxu0
          %v651 = vadd.f32 %v574, %v650
          %652 = vdwg.mxu0
          %v653 = vmax.f32 %v634, 0.0
          %v654 = vmax.f32 %v636, 0.0
          %v655 = vmax.f32 %v639, 0.0
          %v656 = vmax.f32 %v641, 0.0
          %v657 = vmax.f32 %v644, 0.0
          %v658 = vmax.f32 %v646, 0.0
          %v659 = vmax.f32 %v649, 0.0
          %v660 = vmax.f32 %v651, 0.0
          %v661 = vld [vmem:[#allocation9] sm:$0xff]
          %v662 = vld [vmem:[#allocation9 + $0x8] sm:$0xff]
          %v663 = vld [vmem:[#allocation9 + $0x10] sm:$0xff]
          %v664 = vld [vmem:[#allocation9 + $0x18] sm:$0xff]
          %v665 = vld [vmem:[#allocation9 + $0x20] sm:$0xff]
          %v666 = vld [vmem:[#allocation9 + $0x28] sm:$0xff]
          %v667 = vld [vmem:[#allocation9 + $0x30] sm:$0xff]
          %v668 = vld [vmem:[#allocation9 + $0x38] sm:$0xff]
          %v669 = vmul.f32 %v653, %v661
          %v670 = vmul.f32 %v654, %v662
          %v671 = vmul.f32 %v655, %v663
          %v672 = vmul.f32 %v656, %v664
          %v673 = vmul.f32 %v657, %v665
          %v674 = vmul.f32 %v658, %v666
          %v675 = vmul.f32 %v659, %v667
          %v676 = vmul.f32 %v660, %v668
          %v677 = vpack.c.bf16 %v670, %v669
          %v678 = vpack.c.bf16 %v672, %v671
          %v679 = vpack.c.bf16 %v674, %v673
          %v680 = vpack.c.bf16 %v676, %v675
          %v681 = vld [vmem:[#allocation11] sm:$0xf]
          %v682 = vld [vmem:[#allocation11 + $0x4] sm:$0xf]
          %v683 = vld [vmem:[#allocation11 + $0x8] sm:$0xf]
          %v684 = vld [vmem:[#allocation11 + $0xc] sm:$0xf]
          %v685 = vld [vmem:[#allocation11 + $0x10] sm:$0xf]
          %v686 = vld [vmem:[#allocation11 + $0x14] sm:$0xf]
          %v687 = vld [vmem:[#allocation11 + $0x18] sm:$0xf]
          %v688 = vld [vmem:[#allocation11 + $0x1c] sm:$0xf]
          %v689 = vld [vmem:[#allocation11 + $0x20] sm:$0xf]
          %v690 = vld [vmem:[#allocation11 + $0x24] sm:$0xf]
          %v691 = vld [vmem:[#allocation11 + $0x28] sm:$0xf]
          %v692 = vld [vmem:[#allocation11 + $0x2c] sm:$0xf]
          %v693 = vld [vmem:[#allocation11 + $0x30] sm:$0xf]
          %v694 = vld [vmem:[#allocation11 + $0x34] sm:$0xf]
          %v695 = vld [vmem:[#allocation11 + $0x38] sm:$0xf]
          %v696 = vld [vmem:[#allocation11 + $0x3c] sm:$0xf]
          %v713 = vunpack.c.l.b16 %v681
          %v714 = vunpack.c.l.b16 %v682
          %v715 = vunpack.c.l.b16 %v683
          %v716 = vunpack.c.l.b16 %v684
          %v717 = vunpack.c.l.b16 %v685
          %v718 = vunpack.c.l.b16 %v686
          %v719 = vunpack.c.l.b16 %v687
          %v720 = vunpack.c.l.b16 %v688
          %v721 = vunpack.c.l.b16 %v689
          %v722 = vunpack.c.l.b16 %v690
          %v723 = vunpack.c.l.b16 %v691
          %v724 = vunpack.c.l.b16 %v692
          %v725 = vunpack.c.l.b16 %v693
          %v726 = vunpack.c.l.b16 %v694
          %v727 = vunpack.c.l.b16 %v695
          %v728 = vunpack.c.l.b16 %v696
          %v729 = vpack.c.b16 %v714, %v713
          %v730 = vpack.c.b16 %v716, %v715
          %v731 = vpack.c.b16 %v718, %v717
          %v732 = vpack.c.b16 %v720, %v719
          %v733 = vpack.c.b16 %v722, %v721
          %v734 = vpack.c.b16 %v724, %v723
          %v735 = vpack.c.b16 %v726, %v725
          %v736 = vpack.c.b16 %v728, %v727
          %745 = vmatpush.bf16.msra.mxu0 %v736
          %746 = vmatpush.bf16.msra.mxu0 %v735
          %747 = vmatpush.bf16.msra.mxu0 %v734
          %748 = vmatpush.bf16.msra.mxu0 %v733
          %749 = vmatpush.bf16.msra.mxu0 %v732
          %750 = vmatpush.bf16.msra.mxu0 %v731
          %751 = vmatpush.bf16.msra.mxu0 %v730
          %752 = vmatpush.bf16.msra.mxu0 %v729
          %753 = vmatmul.bf16.gmra.mxu0 %v677
          %v754 = vpop.f32.mrf.mxu0
          %v755 = vadd.f32 0.0, %v754
          %v756 = vpop.f32.mrf.mxu0
          %v757 = vadd.f32 0.0, %v756
          %758 = vmatmul.bf16.gmra.mxu0 %v678
          %v759 = vpop.f32.mrf.mxu0
          %v760 = vadd.f32 0.0, %v759
          %v761 = vpop.f32.mrf.mxu0
          %v762 = vadd.f32 0.0, %v761
          %763 = vmatmul.bf16.gmra.mxu0 %v679
          %v764 = vpop.f32.mrf.mxu0
          %v765 = vadd.f32 0.0, %v764
          %v766 = vpop.f32.mrf.mxu0
          %v767 = vadd.f32 0.0, %v766
          %768 = vmatmul.bf16.gmra.mxu0 %v680
          %v769 = vpop.f32.mrf.mxu0
          %v770 = vadd.f32 0.0, %v769
          %v771 = vpop.f32.mrf.mxu0
          %v772 = vadd.f32 0.0, %v771
          %773 = vdwg.mxu0
          %v774 = vpack.c.bf16 %v755, %v755
          %v775 = vpack.c.bf16 %v757, %v757
          %v776 = vpack.c.bf16 %v760, %v760
          %v777 = vpack.c.bf16 %v762, %v762
          %v778 = vpack.c.bf16 %v765, %v765
          %v779 = vpack.c.bf16 %v767, %v767
          %v780 = vpack.c.bf16 %v770, %v770
          %v781 = vpack.c.bf16 %v772, %v772
          %782 = vst [vmem:[%s377] sm:$0xf] %v774
          %783 = vst [vmem:[%s377 + $0x4] sm:$0xf] %v775
          %784 = vst [vmem:[%s377 + $0x8] sm:$0xf] %v776
          %785 = vst [vmem:[%s377 + $0xc] sm:$0xf] %v777
          %786 = vst [vmem:[%s377 + $0x10] sm:$0xf] %v778
          %787 = vst [vmem:[%s377 + $0x14] sm:$0xf] %v779
          %788 = vst [vmem:[%s377 + $0x18] sm:$0xf] %v780
          %789 = vst [vmem:[%s377 + $0x1c] sm:$0xf] %v781
        $region72: #{tpu_custom_call.1} parent=43 // pred_fallthru
          _
        %s790 = sand.u32 %s185, 1
        %s791 = scalar_lea.sflag [#allocation5], %s790
        %s792 = sand.u32 %s185, 1
        %s793 = smul.addr %s792, 32
        %s794 = scalar_lea.vmem [#allocation12], %s793
        // Predicated region
        $region73: #{tpu_custom_call.1} parent=43 // pred_check
          %p795 = pneg %p195
        $region74: #{tpu_custom_call.1} parent=43 // pred_check_branch
          %797 = sbr.rel (%p795) target = $region76
        $region75: #{tpu_custom_call.1} parent=43 // pred_region
          %799 = vsyncadd %s791, 0
          %s800 = smul.addr %s31, 8
          %s801 = smul.addr %s800, 4
          %s802 = scalar_lea.hbm %s6, %s801
          %s803 = sshll.u32 %s794, 4
          %s804 = int_to_ptr.vmem [resolvable:$true] %s803
          %s805 = sshll.u32 %s802, 4
          %s806 = int_to_ptr.hbm [resolvable:$true] %s805
          %811 = dma.vmem_to_hbm [thread:$0]  %s804, 512, %s806, %s791, 64, 64, 4
        $region76: #{tpu_custom_call.1} parent=43 // pred_fallthru
          _
      $region44: #{tpu_custom_call.1} parent=5 // pred_fallthru
        _
      %p812 = scmp.le.s32.totalorder 2, %s22
      // Predicated region
      $region77: #{tpu_custom_call.1} parent=5 // pred_check
        %p813 = pneg %p812
      $region78: #{tpu_custom_call.1} parent=5 // pred_check_branch
        %815 = sbr.rel (%p813) target = $region80
      $region79: #{tpu_custom_call.1} parent=5 // pred_region
        %s816 = ssub.s32 %s22, 2
        // Predicated region
        $region81: #{tpu_custom_call.1} parent=79 // pred_check
          %p817 = pneg %p201
        $region82: #{tpu_custom_call.1} parent=79 // pred_check_branch
          %819 = sbr.rel (%p817) target = $region84
        $region83: #{tpu_custom_call.1} parent=79 // pred_region
          %s820 = sand.u32 %s186, 1
          %s821 = scalar_lea.sflag [#allocation5], %s820
          %s822 = sand.u32 %s186, 1
          %s823 = smul.addr %s822, 32
          %s824 = scalar_lea.vmem [#allocation12], %s823
          %826 = dma.done %s821, 512
        $region84: #{tpu_custom_call.1} parent=79 // pred_fallthru
          _
      $region80: #{tpu_custom_call.1} parent=5 // pred_fallthru
        _
    $region6: #{tpu_custom_call.1} parent=1 // loop_footer
      %s26 = sadd.s32 1, %s22
    $region7: #{tpu_custom_call.1} parent=1 // loop_footer_branch
      %21 = sbr.rel target = $region3
    $region8: #{tpu_custom_call.1} parent=1 // loop_exit
      _
    %827 = vsyncpa [#allocation4], 1
    %s828 = scalar_lea.sflag [#allocation4], 1
    %829 = vsyncpa %s828, 1
    %830 = vsyncpa [#allocation7], 1
    %s831 = scalar_lea.sflag [#allocation7], 1
    %832 = vsyncpa %s831, 1
    %833 = vsyncpa [#allocation10], 1
    %834 = vsyncpa [#allocation5], 1
    %s835 = scalar_lea.sflag [#allocation5], 1
    %836 = vsyncpa %s835, 1

</llo_original>
